<compile_context>
chip_gen: v5e
topology: v5e:2x2
jax: 0.10.0
libtpu: 0.0.40
codegen_flags: <defaults>
</compile_context>

<pallas_src>
import jax
import jax.numpy as jnp
import numpy as np
from jax.experimental import pallas as pl
from jax.experimental.pallas import tpu as pltpu


# ---------------------------------------------------------------------------
# Host-side constant construction (float64, cast to f32 at the end).
# ---------------------------------------------------------------------------
def _make_imdct_basis(frame_length: int, window: str = "sine",
                      transform: str = "cosine") -> np.ndarray:
    """Inverse MDCT basis W of shape (L/2, L) so that x_frame = y @ W."""
    L = frame_length
    Lh = L // 2
    n = np.arange(L, dtype=np.float64) + 0.5 + Lh / 2.0
    k = (np.arange(Lh, dtype=np.float64) + 0.5) * (np.pi / Lh)
    z = 2.0 / Lh
    if window is not False and window != "rectangular":
        z *= 2.0
    z = np.sqrt(z)
    if transform == "cosine":
        Wf = z * np.cos(np.outer(n, k))          # (L, Lh)  forward basis
    elif transform == "sine":
        Wf = z * np.sin(np.outer(n, k))
    else:
        raise ValueError(transform)
    return np.ascontiguousarray(Wf.T)            # (Lh, L), float64


def _make_window(frame_length: int, window: str = "sine") -> np.ndarray:
    L = frame_length
    n = np.arange(L, dtype=np.float64) + 0.5
    if window == "sine":
        w = np.sin(np.pi * n / L)
    elif window == "vorbis":
        w = np.sin(0.5 * np.pi * np.sin(np.pi * n / L) ** 2)
    elif window == "rectangular":
        w = np.ones(L)
    else:
        # TODO(synk): 'kbd' (Kaiser-Bessel-derived) window precompute not implemented.
        raise ValueError(window)
    return w


def _make_folded_basis(frame_length: int, window: str = "sine",
                       transform: str = "cosine") -> np.ndarray:
    """Stacked basis (2*Lh, P) with window and the 0.5 OA divisor folded in.

    out[j] = y[j] @ W_tail + y[j+1] @ W_head
           = concat(y[j], y[j+1]) @ concat(W_tail, W_head, axis=0)
    where W_tail = W[:, P:] * win[P:] * 0.5 and W_head = W[:, :P] * win[:P] * 0.5.
    (0.5 is the overlap count for hop = L/2, center=True, in the kept region.)
    """
    L = frame_length
    P = L // 2
    W = _make_imdct_basis(L, window, transform)       # (Lh, L), float64
    win = _make_window(L, window)                     # (L,),   float64
    W_tail = W[:, P:] * win[P:] * 0.5                 # (Lh, P)
    W_head = W[:, :P] * win[:P] * 0.5                 # (Lh, P)
    W_cat = np.concatenate([W_tail, W_head], axis=0)  # (2*Lh, P)
    return np.ascontiguousarray(W_cat).astype(np.float32)


# ---------------------------------------------------------------------------
# Kernel: one MXU matmul per (batch, frame-tile) grid step.
# ---------------------------------------------------------------------------
def _imdct_oa_kernel(y_ref, w_ref, out_ref):
    # y_ref:   (1, TN, 2*Lh)  rows are [y[j] | y[j+1]]
    # w_ref:   (2*Lh, P)      folded basis (window & overlap divisor baked in)
    # out_ref: (1, TN, P)     overlap-added waveform chunks (lane-dense, width P)
    out_ref[0] = jnp.dot(
        y_ref[0], w_ref[...], preferred_element_type=jnp.float32
    ).astype(out_ref.dtype)


def _choose_frame_tile(n_out: int, lh: int, p: int,
                       budget_bytes: int = 36 * 1024 * 1024) -> int:
    """Frame-axis tile TN: multiple of 8 (prefer 256), bounded by a VMEM budget
    that is safe on all generations (v7x has 64 MiB physical VMEM)."""
    if n_out <= 512:
        return n_out                       # full axis -> no partial blocks
    itemsize = 4
    w_bytes = 2 * (2 * lh) * p * itemsize              # double-buffered basis
    per_frame = 2 * (2 * lh + p) * itemsize            # double-buffered y + out rows
    tn = (budget_bytes - w_bytes) // max(per_frame, 1)
    tn = int(min(512, max(8, tn)))
    tn -= tn % 8
    if tn >= 256:
        tn -= tn % 256                     # align M to MXU tile on v6e/v7x
    return max(tn, 8)


def imdct(y: jax.Array, frame_length: int, window: str = "sine",
          transform: str = "cosine") -> jax.Array:
    """y: (B, N, L/2) float -> (B, (N-1)*L/2) float32."""
    B, N, Lh = y.shape
    L = frame_length
    assert L >= 2 and L % 2 == 0
    assert 2 * Lh == L, "dimension of input must be L/2"
    assert N >= 2
    P = L // 2
    n_out = N - 1

    W_cat = jnp.asarray(_make_folded_basis(L, window, transform))    # (2*Lh, P)
    # Stack consecutive frames so the whole overlap-add is one matmul with
    # contraction dim K = 2*Lh (better MXU utilization for short frames) and
    # a lane-dense output of width P — no lane-offset slices in the kernel.
    y = y.astype(jnp.float32)
    y_cat = jnp.concatenate([y[:, :-1, :], y[:, 1:, :]], axis=-1)    # (B, N-1, 2*Lh)

    TN = _choose_frame_tile(n_out, Lh, P)
    grid = (B, pl.cdiv(n_out, TN))

    # Scoped-VMEM estimate: double-buffered y/out tiles + (double-buffered) basis.
    tile_bytes = 2 * (TN * 2 * Lh + TN * P) * 4 + 2 * (2 * Lh * P) * 4
    vmem_limit = int(min(max(tile_bytes * 5 // 4 + (1 << 20), 16 << 20), 48 << 20))

    cost = pl.CostEstimate(
        flops=2 * B * n_out * (2 * Lh) * P,
        transcendentals=0,
        bytes_accessed=(y_cat.size + W_cat.size + B * n_out * P) * 4,
    )

    out = pl.pallas_call(
        _imdct_oa_kernel,
        out_shape=jax.ShapeDtypeStruct((B, n_out, P), jnp.float32),
        grid_spec=pltpu.PrefetchScalarGridSpec(
            num_scalar_prefetch=0,
            grid=grid,
            in_specs=[
                pl.BlockSpec((1, TN, 2 * Lh), lambda b, n: (b, n, 0)),
                pl.BlockSpec((2 * Lh, P), lambda b, n: (0, 0)),
            ],
            out_specs=pl.BlockSpec((1, TN, P), lambda b, n: (b, n, 0)),
        ),
        compiler_params=pltpu.CompilerParams(
            dimension_semantics=("parallel", "parallel"),
            vmem_limit_bytes=vmem_limit,
        ),
        cost_estimate=cost,
    )(y_cat, W_cat)
    return out.reshape(B, n_out * P)


# ---------------------------------------------------------------------------
# Pure-JAX reference (unfused math, for correctness check).
# ---------------------------------------------------------------------------
def imdct_ref(y: jax.Array, frame_length: int, window: str = "sine",
              transform: str = "cosine") -> jax.Array:
    L = frame_length
    P = L // 2
    W = jnp.asarray(_make_imdct_basis(L, window, transform).astype(np.float32))
    win = jnp.asarray(_make_window(L, window).astype(np.float32))
    frames = jnp.einsum("bnk,kl->bnl", y.astype(jnp.float32), W) * win
    out = (frames[:, :-1, P:] + frames[:, 1:, :P]) * 0.5
    return out.reshape(y.shape[0], -1)


if __name__ == "__main__":
    frame_length = 16          # L
    B, N = 2, 8                # batch, number of frames
    Lh = frame_length // 2

    key = jax.random.PRNGKey(0)
    y = jax.random.normal(key, (B, N, Lh), dtype=jnp.float32)

    out = imdct(y, frame_length, window="sine")
    out = jax.block_until_ready(out)

    assert out.shape == (B, (N - 1) * Lh), out.shape
    ref = imdct_ref(y, frame_length, window="sine")
    np.testing.assert_allclose(np.asarray(out), np.asarray(ref),
                               rtol=1e-5, atol=1e-5)
    print("KERNEL_OK")
</pallas_src>

<mosaic_0001>
module attributes {stable_mosaic.version = 11 : i64} {
  func.func @_imdct_oa_kernel(%arg0: i32, %arg1: i32, %arg2: memref<1x7x16xf32, #tpu.memory_space<vmem>>, %arg3: memref<16x8xf32, #tpu.memory_space<vmem>>, %arg4: memref<1x7x8xf32, #tpu.memory_space<vmem>>) attributes {dimension_semantics = [#tpu.dimension_semantics<parallel>, #tpu.dimension_semantics<parallel>], iteration_bounds = array<i64: 2, 1>, scalar_prefetch = 0 : i64, scratch_operands = 0 : i64, tpu.core_type = #tpu.core_type<tc>, window_params = [{transform_indices = @transform_0, window_bounds = array<i64: 1, 7, 16>}, {pipeline_mode = #tpu.pipeline_mode<synchronous>, transform_indices = @transform_1, window_bounds = array<i64: 16, 8>}, {transform_indices = @transform_2, window_bounds = array<i64: 1, 7, 8>}]} {
    %c0 = arith.constant 0 : index
    %c0_0 = arith.constant 0 : index
    %c0_1 = arith.constant 0 : index
    %0 = vector.load %arg2[%c0, %c0_0, %c0_1] : memref<1x7x16xf32, #tpu.memory_space<vmem>>, vector<1x7x16xf32>
    %1 = vector.shape_cast %0 : vector<1x7x16xf32> to vector<7x16xf32>
    %c0_2 = arith.constant 0 : index
    %c0_3 = arith.constant 0 : index
    %2 = vector.load %arg3[%c0_2, %c0_3] : memref<16x8xf32, #tpu.memory_space<vmem>>, vector<16x8xf32>
    %cst = arith.constant dense<0.000000e+00> : vector<7x8xf32>
    %3 = tpu.matmul %1, %2, %cst {dimension_numbers = #tpu.dot_dimension_numbers<[1], [0], [0], [1], [0, 0, 1, 1], [], []>} : vector<7x16xf32>, vector<16x8xf32>, vector<7x8xf32> -> vector<7x8xf32>
    %c0_4 = arith.constant 0 : index
    %c0_5 = arith.constant 0 : index
    %c0_6 = arith.constant 0 : index
    %4 = vector.load %arg4[%c0_4, %c0_5, %c0_6] : memref<1x7x8xf32, #tpu.memory_space<vmem>>, vector<1x7x8xf32>
    %5 = vector.shape_cast %4 : vector<1x7x8xf32> to vector<7x8xf32>
    %6 = vector.shape_cast %3 : vector<7x8xf32> to vector<1x7x8xf32>
    tpu.vector_store %arg4[%c0_4, %c0_5, %c0_6], %6 {strides = array<i32>} : memref<1x7x8xf32, #tpu.memory_space<vmem>>, vector<1x7x8xf32>,
    return
  }
  func.func @transform_0(%arg0: i32, %arg1: i32) -> (i32, i32, i32) {
    %c0_i32 = arith.constant 0 : i32
    %c0_i32_0 = arith.constant 0 : i32
    return %arg0, %arg1, %c0_i32 : i32, i32, i32
  }
  func.func @transform_1(%arg0: i32, %arg1: i32) -> (i32, i32) {
    %c0_i32 = arith.constant 0 : i32
    %c0_i32_0 = arith.constant 0 : i32
    %c0_i32_1 = arith.constant 0 : i32
    return %c0_i32, %c0_i32_0 : i32, i32
  }
  func.func @transform_2(%arg0: i32, %arg1: i32) -> (i32, i32, i32) {
    %c0_i32 = arith.constant 0 : i32
    %c0_i32_0 = arith.constant 0 : i32
    return %arg0, %arg1, %c0_i32 : i32, i32, i32
  }
}

</mosaic_0001>

<llo_original>
// kernel: tpu_custom_call.1
$region0: #{tpu_custom_call.1}
  #allocation0 [shape = 'u32[]', space=smem, size = 0x4, offset = 0x4, fixed_abs, tag = 'smem constant byte address 0x4 - core index']
  #allocation1 [shape = 'u32[72,128]{1,0:T(1,128)}', space=vmem, size = 0x9000, scoped, tag = 'internal scratch']
  %s0 = inlined_call_operand.vmem [shape: f32[2,7,16], index: 0, kind: input, shape index: {}]
  %s1 = inlined_call_operand.vmem [shape: f32[16,8], index: 1, kind: input, shape index: {}]
  %s2 = inlined_call_operand.vmem [shape: f32[2,7,8], index: 2, kind: output, shape index: {}]
  %s3 = sld [smem:[#allocation0]]
  $region41: #{tpu_custom_call.1} parent=0
    _
  %s5 = ssub.s32 1, %s3
  %s6 = scalar_select 0, %s5, %s3
  loop: start=0, step=1, limit=4
  $region2: #{tpu_custom_call.1} parent=0 // loop_pre_header
    _
  $region3: #{tpu_custom_call.1} parent=0 // loop_header
    %s8 = sphi 0, %s12
    %p9 = scmp.ge.s32.totalorder %s8, 4
    %s15 = sphi 0, %s27
    %s16 = sphi 0, %s23
    %s17 = sphi 0, %s15
    %s18 = sphi 0, %s16
    %s19 = sphi 0, %s17
    %s20 = sphi 0, %s18
    %s32 = sphi 0, %s34
    %s35 = sphi 0, %s32
    %s36 = sphi 0, %s35
    %s52 = sphi 0, %s36
    %s56 = sphi 0, %s56
    %s58 = sphi 0, %s56
    %s59 = sphi 0, %s58
    %s73 = sphi 0, %s59
    %s81 = sphi 0, %s83
    %s84 = sphi 0, %s81
    %s85 = sphi 0, %s84
    %s101 = sphi 0, %s85
  $region4: #{tpu_custom_call.1} parent=0 // loop_header_branch
    %11 = sbr.rel (%p9) target = $region8
  $region5: #{tpu_custom_call.1} parent=0 // loop_body
    %s13 = ssub.s32 %s8, 1
    %s14 = ssub.s32 %s8, 2
    %s21 = sadd.s32 1, %s16
    %p22 = scmp.ge.s32.totalorder %s21, 1
    %s23 = scalar_select %p22, 0, %s21
    %s24 = sadd.s32 1, %s15
    %s25 = scalar_select %p22, %s24, %s15
    %p26 = scmp.ge.s32.totalorder %s25, 2
    %s27 = scalar_select %p26, 0, %s25
    %s28 = ssub.s32 %s15, %s27
    %s29 = ssub.s32 %s16, %s23
    %s30 = sor.u32 %s28, %s29
    %p31 = scmp.eq.s32.totalorder %s30, 0
    %s33 = sadd.s32 %s32, 1
    %s34 = scalar_select %p31, %s32, %s33
    %p37 = pneg %p31
    %p38 = scmp.eq.s32.totalorder %s8, 1
    %p39 = por %p37, %p38
    %p40 = scmp.ne.s32.totalorder %s32, %s35
    %p41 = scmp.eq.s32.totalorder %s8, 0
    %p42 = por %p40, %p41
    %p43 = scmp.ne.s32.totalorder %s32, %s35
    %p44 = scmp.eq.s32.totalorder %s13, 1
    %p45 = por %p43, %p44
    %p46 = scmp.ne.s32.totalorder %s35, %s36
    %p47 = scmp.eq.s32.totalorder %s13, 0
    %p48 = por %p46, %p47
    %p49 = scmp.ne.s32.totalorder %s35, %s36
    %p50 = scmp.eq.s32.totalorder %s14, 1
    %p51 = por %p49, %p50
    %p53 = scmp.ne.s32.totalorder %s36, %s52
    %p54 = scmp.eq.s32.totalorder %s14, 0
    %p55 = por %p53, %p54
    %s57 = sadd.s32 %s56, 1
    %p60 = scmp.eq.s32.totalorder %s8, 1
    %p61 = scmp.ne.s32.totalorder %s56, %s58
    %p62 = scmp.eq.s32.totalorder %s8, 0
    %p63 = por %p61, %p62
    %p64 = scmp.ne.s32.totalorder %s56, %s58
    %p65 = scmp.eq.s32.totalorder %s13, 1
    %p66 = por %p64, %p65
    %p67 = scmp.ne.s32.totalorder %s58, %s59
    %p68 = scmp.eq.s32.totalorder %s13, 0
    %p69 = por %p67, %p68
    %p70 = scmp.ne.s32.totalorder %s58, %s59
    %p71 = scmp.eq.s32.totalorder %s14, 1
    %p72 = por %p70, %p71
    %p74 = scmp.ne.s32.totalorder %s59, %s73
    %p75 = scmp.eq.s32.totalorder %s14, 0
    %p76 = por %p74, %p75
    %s77 = ssub.s32 %s15, %s27
    %s78 = ssub.s32 %s16, %s23
    %s79 = sor.u32 %s77, %s78
    %p80 = scmp.eq.s32.totalorder %s79, 0
    %s82 = sadd.s32 %s81, 1
    %s83 = scalar_select %p80, %s81, %s82
    %p86 = pneg %p80
    %p87 = scmp.eq.s32.totalorder %s8, 1
    %p88 = por %p86, %p87
    %p89 = scmp.ne.s32.totalorder %s81, %s84
    %p90 = scmp.eq.s32.totalorder %s8, 0
    %p91 = por %p89, %p90
    %p92 = scmp.ne.s32.totalorder %s81, %s84
    %p93 = scmp.eq.s32.totalorder %s13, 1
    %p94 = por %p92, %p93
    %p95 = scmp.ne.s32.totalorder %s84, %s85
    %p96 = scmp.eq.s32.totalorder %s13, 0
    %p97 = por %p95, %p96
    %p98 = scmp.ne.s32.totalorder %s84, %s85
    %p99 = scmp.eq.s32.totalorder %s14, 1
    %p100 = por %p98, %p99
    %p102 = scmp.ne.s32.totalorder %s85, %s101
    %p103 = scmp.eq.s32.totalorder %s14, 0
    %p104 = por %p102, %p103
    %p105 = scmp.le.s32.totalorder 1, %s8
    %p106 = scmp.lt.s32.totalorder %s8, 3
    %p107 = pnand %p105, %p106
    %p108 = pneg %p107
    // Predicated region
    $region9: #{tpu_custom_call.1} parent=5 // pred_check
      _
    $region10: #{tpu_custom_call.1} parent=5 // pred_check_branch
      %110 = sbr.rel (%p107) target = $region12
    $region11: #{tpu_custom_call.1} parent=5 // pred_region
      %s111 = ssub.s32 %s8, 1
      // Predicated region
      $region13: #{tpu_custom_call.1} parent=11 // pred_check
        %p112 = pneg %p69
      $region14: #{tpu_custom_call.1} parent=11 // pred_check_branch
        %114 = sbr.rel (%p112) target = $region16
      $region15: #{tpu_custom_call.1} parent=11 // pred_region
        _
      $region16: #{tpu_custom_call.1} parent=11 // pred_fallthru
        _
    $region12: #{tpu_custom_call.1} parent=5 // pred_fallthru
      _
    %p115 = scmp.lt.s32.totalorder %s8, 2
    // Predicated region
    $region17: #{tpu_custom_call.1} parent=5 // pred_check
      %p116 = pneg %p115
    $region18: #{tpu_custom_call.1} parent=5 // pred_check_branch
      %118 = sbr.rel (%p116) target = $region20
    $region19: #{tpu_custom_call.1} parent=5 // pred_region
      // Predicated region
      $region21: #{tpu_custom_call.1} parent=19 // pred_check
        %p119 = pneg %p42
      $region22: #{tpu_custom_call.1} parent=19 // pred_check_branch
        %121 = sbr.rel (%p119) target = $region24
      $region23: #{tpu_custom_call.1} parent=19 // pred_region
        %p122 = scmp.lt.s32.totalorder %s15, 1
        %s123 = scalar_select %p122, %s15, 1
        %p124 = scmp.lt.s32.totalorder %s16, 0
        %s125 = scalar_select %p124, %s16, 0
        %s126 = sadd.s32 %s125, %s123
        %s127 = smul.addr %s126, 8
        %s128 = scalar_lea.vmem %s0, %s127
      $region24: #{tpu_custom_call.1} parent=19 // pred_fallthru
        _
    $region20: #{tpu_custom_call.1} parent=5 // pred_fallthru
      _
    %p129 = scmp.le.s32.totalorder 1, %s8
    %p130 = scmp.lt.s32.totalorder %s8, 3
    %p131 = pnand %p129, %p130
    %p132 = pneg %p131
    // Predicated region
    $region25: #{tpu_custom_call.1} parent=5 // pred_check
      _
    $region26: #{tpu_custom_call.1} parent=5 // pred_check_branch
      %134 = sbr.rel (%p131) target = $region28
    $region27: #{tpu_custom_call.1} parent=5 // pred_region
      %s135 = ssub.s32 %s8, 1
      %p136 = scmp.lt.s32.totalorder %s17, 1
      %s137 = scalar_select %p136, %s17, 1
      %p138 = scmp.lt.s32.totalorder %s18, 0
      %s139 = scalar_select %p138, %s18, 0
      %s140 = sadd.s32 %s139, %s137
      %s141 = smul.addr %s140, 8
      %s142 = scalar_lea.vmem %s0, %s141
      %p143 = pneg %p48
      %p144 = pneg %p45
      %p145 = pneg %p69
      %p146 = pneg %p66
      %p147 = pneg %p97
      %p148 = pneg %p94
      %p149 = scmp.lt.s32.totalorder %s17, 1
      %s150 = scalar_select %p149, %s17, 1
      %p151 = scmp.lt.s32.totalorder %s18, 0
      %s152 = scalar_select %p151, %s18, 0
      %s153 = sadd.s32 %s152, %s150
      %s154 = smul.addr %s153, 8
      %s155 = scalar_lea.vmem %s2, %s154
      %p156 = scmp.lt.s32.totalorder %s17, 1
      %s157 = scalar_select %p156, %s17, 1
      %p158 = scmp.lt.s32.totalorder %s18, 0
      %s159 = scalar_select %p158, %s18, 0
      %s160 = sadd.s32 %s159, %s157
      %s161 = smul.addr %s160, 8
      %s162 = scalar_lea.vmem %s0, %s161
      %p163 = scmp.lt.s32.totalorder %s17, 1
      %s164 = scalar_select %p163, %s17, 1
      %p165 = scmp.lt.s32.totalorder %s18, 0
      %s166 = scalar_select %p165, %s18, 0
      %s167 = sadd.s32 %s166, %s164
      %s168 = smul.addr %s167, 8
      %s169 = scalar_lea.vmem %s2, %s168
      %v170 = vld [vmem:[%s162] sm:$0x7f]
      %v171 = vld [vmem:[%s1] sm:$0xff]
      %v172 = vld [vmem:[%s1 + $0x8] sm:$0xff]
      %vm173 = vcmask 130048
      %v175 = vsel %vm173, %v170, 0
      %177 = vmatpush.msra.mxu0 0.0
      %178 = vmatpush.msra.mxu0 0.0
      %179 = vmatpush.msra.mxu0 0.0
      %180 = vmatpush.msra.mxu0 0.0
      %181 = vmatpush.msra.mxu0 0.0
      %182 = vmatpush.msra.mxu0 0.0
      %183 = vmatpush.msra.mxu0 0.0
      %184 = vmatpush.msra.mxu0 0.0
      %185 = vmatpush.msra.mxu0 0.0
      %186 = vmatpush.msra.mxu0 0.0
      %187 = vmatpush.msra.mxu0 0.0
      %188 = vmatpush.msra.mxu0 0.0
      %189 = vmatpush.msra.mxu0 0.0
      %190 = vmatpush.msra.mxu0 0.0
      %191 = vmatpush.msra.mxu0 %v172
      %192 = vmatpush.msra.mxu0 %v171
      %193 = vmatmul.f32.gmra.mxu0 %v175
      %v194 = vpop.f32.mrf.mxu0
      %v195 = vadd.f32 0.0, %v194
      %196 = vdwg.mxu0
      %vm197 = vcmask 63488
      %198 = vst.msk [vmem:[%s169] sm:$0x7f] %vm197, %v195
      %p199 = scmp.lt.s32.totalorder %s17, 1
      %s200 = scalar_select %p199, %s17, 1
      %p201 = scmp.lt.s32.totalorder %s18, 0
      %s202 = scalar_select %p201, %s18, 0
      %s203 = sadd.s32 %s202, %s200
      %s204 = smul.addr %s203, 8
      %s205 = scalar_lea.vmem %s2, %s204
      // Predicated region
      $region29: #{tpu_custom_call.1} parent=27 // pred_check
        %p206 = pneg %p94
      $region30: #{tpu_custom_call.1} parent=27 // pred_check_branch
        %208 = sbr.rel (%p206) target = $region32
      $region31: #{tpu_custom_call.1} parent=27 // pred_region
        _
      $region32: #{tpu_custom_call.1} parent=27 // pred_fallthru
        _
    $region28: #{tpu_custom_call.1} parent=5 // pred_fallthru
      _
    %p209 = scmp.le.s32.totalorder 2, %s8
    // Predicated region
    $region33: #{tpu_custom_call.1} parent=5 // pred_check
      %p210 = pneg %p209
    $region34: #{tpu_custom_call.1} parent=5 // pred_check_branch
      %212 = sbr.rel (%p210) target = $region36
    $region35: #{tpu_custom_call.1} parent=5 // pred_region
      %s213 = ssub.s32 %s8, 2
      // Predicated region
      $region37: #{tpu_custom_call.1} parent=35 // pred_check
        %p214 = pneg %p100
      $region38: #{tpu_custom_call.1} parent=35 // pred_check_branch
        %216 = sbr.rel (%p214) target = $region40
      $region39: #{tpu_custom_call.1} parent=35 // pred_region
        %p217 = scmp.lt.s32.totalorder %s19, 1
        %s218 = scalar_select %p217, %s19, 1
        %p219 = scmp.lt.s32.totalorder %s20, 0
        %s220 = scalar_select %p219, %s20, 0
        %s221 = sadd.s32 %s220, %s218
        %s222 = smul.addr %s221, 8
        %s223 = scalar_lea.vmem %s2, %s222
      $region40: #{tpu_custom_call.1} parent=35 // pred_fallthru
        _
    $region36: #{tpu_custom_call.1} parent=5 // pred_fallthru
      _
  $region6: #{tpu_custom_call.1} parent=0 // loop_footer
    %s12 = sadd.s32 1, %s8
  $region7: #{tpu_custom_call.1} parent=0 // loop_footer_branch
    %7 = sbr.rel target = $region3
  $region8: #{tpu_custom_call.1} parent=0 // loop_exit
    _

</llo_original>
